<compile_context>
chip_gen: v5e
topology: v5e:2x2
jax: 0.10.0
libtpu: 0.0.40
codegen_flags: <defaults>
</compile_context>

<pallas_src>
import functools

import jax
import jax.numpy as jnp
from jax.experimental import pallas as pl
from jax.experimental.pallas import tpu as pltpu


def _gat_kernel(x_ref, w_ref, a_dst_ref, bias_ref, o_ref, *, alpha, concat, fout):
    # x_ref:     (M, Fin)        flattened batch block, M = Bt*N
    # w_ref:     (Fin, Fout+1)   [W | W @ a_src]
    # a_dst_ref: (1, Fout)       second half of `a` (applied to destination node h_j)
    # bias_ref:  (M, M)          block-diagonal mask bias (0 on edges, -9e15 elsewhere)
    # o_ref:     (M, Fout)
    # One fused MXU matmul; column `fout` is the source attention score s_src.
    h_aug = jnp.dot(x_ref[...], w_ref[...],
                    preferred_element_type=jnp.float32)          # [M, Fout+1]
    h = h_aug[:, :fout]                                          # [M, Fout]
    s_src = h_aug[:, fout:fout + 1]                              # [M, 1]  (sublane layout)

    # Destination term: per-row reduce, broadcast along lanes (j axis of e).
    s_dst = jnp.sum(h * a_dst_ref[...], axis=-1)                 # [M]

    # e[i, j] = leakyrelu(s_src[i] + s_dst[j]); block-diag bias masks non-edges and
    # cross-graph pairs (their exp underflows to exactly 0 in f32).
    e = s_src + s_dst[None, :]                                   # [M, M]
    e = jnp.where(e > 0, e, alpha * e)                           # LeakyReLU(alpha)
    att = e + bias_ref[...]

    m = jnp.max(att, axis=-1, keepdims=True)
    p = jnp.exp(att - m)
    d = jnp.sum(p, axis=-1, keepdims=True)
    r = pl.reciprocal(d, approx=True)                            # EUP vrcp (free slot)
    r = r * (2.0 - d * r)                                        # one Newton step
    att = p * r

    # h' = att @ h  — one (M, M) @ (M, Fout) MXU matmul (block-diagonal att).
    h_prime = jnp.dot(att, h, preferred_element_type=jnp.float32)

    if concat:
        # ELU; clamp the exp argument so the untaken positive branch never overflows.
        h_prime = jnp.where(h_prime > 0, h_prime,
                            jnp.exp(jnp.minimum(h_prime, 0.0)) - 1.0)

    o_ref[...] = h_prime.astype(o_ref.dtype)


def graph_attention_layer(x, adj, W, a, *, alpha=0.2, concat=True, batch_block=None):
    """Pallas forward of GraphAttentionLayer (eval mode).

    x:   [bs, N, Fin] float32
    adj: [N, N]       float32 (>0 means edge; self-loops assumed, as in the model)
    W:   [Fin, Fout]
    a:   [2*Fout, 1]
    """
    bs, N, Fin = x.shape
    Fout = W.shape[1]

    if batch_block is None:
        # Default: a SINGLE grid step. Extra steps are pure pipeline overhead on 1-TC
        # chips (v5e/v6e) and not worth it on v7x at µs-scale either. Only block the
        # batch when the flattened (Bt*N, Bt*N) attention tile would get large.
        max_rows = 512
        batch_block = bs
        if bs * N > max_rows:
            d = max(1, max_rows // N)
            while d > 1 and bs % d != 0:
                d -= 1
            batch_block = d
    assert bs % batch_block == 0, "batch_block must divide batch size"
    num_blocks = bs // batch_block
    M = batch_block * N

    # Fold a_src into the projection: [W | W @ a_src].
    a_src = a[:Fout, :]                                          # [Fout, 1]
    W_aug = jnp.concatenate([W, W @ a_src], axis=1)              # [Fin, Fout+1]
    a_dst = a[Fout:, 0].reshape(1, Fout)                         # [1, Fout]

    # Precomputed block-diagonal mask bias: adjacency bias on diagonal graph blocks,
    # -9e15 on cross-graph blocks (identical structure for every grid step).
    neg = jnp.float32(-9.0e15)
    adj_bias = jnp.where(adj > 0, 0.0, neg).astype(jnp.float32)  # [N, N]
    eye_b = jnp.eye(batch_block, dtype=jnp.float32)
    bias = (jnp.kron(eye_b, adj_bias)
            + neg * jnp.kron(1.0 - eye_b, jnp.ones((N, N), jnp.float32)))  # [M, M]

    x2d = x.reshape(bs * N, Fin)

    kernel = functools.partial(_gat_kernel, alpha=float(alpha), concat=concat, fout=Fout)

    cost = pl.CostEstimate(
        flops=(2 * bs * N * Fin * (Fout + 1)          # fused projection matmul
               + 2 * bs * N * Fout                    # a_dst reduce
               + 6 * num_blocks * M * M               # e / leakyrelu / bias / softmax
               + 2 * num_blocks * M * M * Fout),      # att @ h
        transcendentals=num_blocks * M * M + (bs * N * Fout if concat else 0),
        bytes_accessed=4 * (x.size + W_aug.size + a_dst.size
                            + num_blocks * bias.size + bs * N * Fout),
    )

    out2d = pl.pallas_call(
        kernel,
        out_shape=jax.ShapeDtypeStruct((bs * N, Fout), x.dtype),
        grid=(num_blocks,),
        in_specs=[
            pl.BlockSpec((M, Fin), lambda b: (b, 0)),
            pl.BlockSpec((Fin, Fout + 1), lambda b: (0, 0)),
            pl.BlockSpec((1, Fout), lambda b: (0, 0)),
            pl.BlockSpec((M, M), lambda b: (0, 0)),
        ],
        out_specs=pl.BlockSpec((M, Fout), lambda b: (b, 0)),
        compiler_params=pltpu.CompilerParams(
            dimension_semantics=("parallel",)),
        cost_estimate=cost,
    )(x2d, W_aug, a_dst, bias)

    return out2d.reshape(bs, N, Fout)


def _reference(x, adj, W, a, *, alpha=0.2, concat=True):
    """Pure-JAX reference mirroring the PyTorch forward (eval mode, dropout=identity)."""
    h = jnp.einsum("bnf,fo->bno", x, W)
    Fout = W.shape[1]
    s_src = h @ a[:Fout, 0]                    # [bs, N]
    s_dst = h @ a[Fout:, 0]                    # [bs, N]
    e = s_src[:, :, None] + s_dst[:, None, :]  # [bs, N, N]
    e = jnp.where(e > 0, e, alpha * e)
    att = jnp.where(adj[None] > 0, e, -9.0e15)
    att = jax.nn.softmax(att, axis=-1)
    h_prime = jnp.einsum("bij,bjo->bio", att, h)
    if concat:
        h_prime = jnp.where(h_prime > 0, h_prime, jnp.exp(jnp.minimum(h_prime, 0.0)) - 1.0)
    return h_prime


def _xavier_uniform(key, shape, gain):
    fan_in, fan_out = shape[0], shape[1]
    bound = gain * (6.0 / (fan_in + fan_out)) ** 0.5
    return jax.random.uniform(key, shape, jnp.float32, -bound, bound)


if __name__ == "__main__":
    # Small shapes consistent with the module's forward:
    #   input [batch, num_nodes, in_features], adj [num_nodes, num_nodes]
    bs, N, Fin, Fout = 8, 8, 16, 32
    alpha = 0.2

    key = jax.random.PRNGKey(0)
    kx, kadj, kw, ka = jax.random.split(key, 4)

    x = jax.random.normal(kx, (bs, N, Fin), jnp.float32)
    # random 0/1 adjacency with self-loops
    adj = (jax.random.uniform(kadj, (N, N)) > 0.5).astype(jnp.float32)
    adj = jnp.maximum(adj, jnp.eye(N, dtype=jnp.float32))

    W = _xavier_uniform(kw, (Fin, Fout), gain=1.414)
    a = _xavier_uniform(ka, (2 * Fout, 1), gain=1.414)

    out = graph_attention_layer(x, adj, W, a, alpha=alpha, concat=True)
    out = jax.block_until_ready(out)

    ref = _reference(x, adj, W, a, alpha=alpha, concat=True)
    assert out.shape == (bs, N, Fout)
    assert jnp.allclose(out, ref, atol=3e-5, rtol=3e-5), "mismatch vs JAX reference"

    print("KERNEL_OK")
</pallas_src>

<mosaic_0001>
module attributes {stable_mosaic.version = 11 : i64} {
  func.func @_gat_kernel(%arg0: i32, %arg1: memref<64x16xf32, #tpu.memory_space<vmem>>, %arg2: memref<16x33xf32, #tpu.memory_space<vmem>>, %arg3: memref<1x32xf32, #tpu.memory_space<vmem>>, %arg4: memref<64x64xf32, #tpu.memory_space<vmem>>, %arg5: memref<64x32xf32, #tpu.memory_space<vmem>>) attributes {dimension_semantics = [#tpu.dimension_semantics<parallel>], iteration_bounds = array<i64: 1>, scalar_prefetch = 0 : i64, scratch_operands = 0 : i64, tpu.core_type = #tpu.core_type<tc>, window_params = [{transform_indices = @transform_0, window_bounds = array<i64: 64, 16>}, {pipeline_mode = #tpu.pipeline_mode<synchronous>, transform_indices = @transform_1, window_bounds = array<i64: 16, 33>}, {pipeline_mode = #tpu.pipeline_mode<synchronous>, transform_indices = @transform_2, window_bounds = array<i64: 1, 32>}, {pipeline_mode = #tpu.pipeline_mode<synchronous>, transform_indices = @transform_3, window_bounds = array<i64: 64, 64>}, {transform_indices = @transform_4, window_bounds = array<i64: 64, 32>}]} {
    %c0 = arith.constant 0 : index
    %c0_0 = arith.constant 0 : index
    %0 = vector.load %arg1[%c0, %c0_0] : memref<64x16xf32, #tpu.memory_space<vmem>>, vector<64x16xf32>
    %c0_1 = arith.constant 0 : index
    %c0_2 = arith.constant 0 : index
    %1 = vector.load %arg2[%c0_1, %c0_2] : memref<16x33xf32, #tpu.memory_space<vmem>>, vector<16x33xf32>
    %cst = arith.constant dense<0.000000e+00> : vector<64x33xf32>
    %2 = tpu.matmul %0, %1, %cst {dimension_numbers = #tpu.dot_dimension_numbers<[1], [0], [0], [1], [0, 0, 1, 1], [], []>} : vector<64x16xf32>, vector<16x33xf32>, vector<64x33xf32> -> vector<64x33xf32>
    %3 = vector.extract_strided_slice %2 {offsets = [0, 0], sizes = [64, 32], strides = [1, 1]} : vector<64x33xf32> to vector<64x32xf32>
    %4 = vector.extract_strided_slice %2 {offsets = [0, 32], sizes = [64, 1], strides = [1, 1]} : vector<64x33xf32> to vector<64x1xf32>
    %c0_3 = arith.constant 0 : index
    %c0_4 = arith.constant 0 : index
    %5 = vector.load %arg3[%c0_3, %c0_4] : memref<1x32xf32, #tpu.memory_space<vmem>>, vector<1x32xf32>
    %6 = vector.broadcast %5 : vector<1x32xf32> to vector<64x32xf32>
    %7 = arith.mulf %3, %6 : vector<64x32xf32>
    %cst_5 = arith.constant dense<0.000000e+00> : vector<64xf32>
    %8 = vector.multi_reduction <add>, %7, %cst_5 [1] : vector<64x32xf32> to vector<64xf32>
    %9 = vector.shape_cast %8 : vector<64xf32> to vector<1x64xf32>
    %10 = vector.broadcast %4 : vector<64x1xf32> to vector<64x64xf32>
    %11 = vector.broadcast %9 : vector<1x64xf32> to vector<64x64xf32>
    %12 = arith.addf %10, %11 : vector<64x64xf32>
    %cst_6 = arith.constant 0.000000e+00 : f32
    %13 = vector.broadcast %cst_6 : f32 to vector<64x64xf32>
    %14 = arith.cmpf ogt, %12, %13 : vector<64x64xf32>
    %cst_7 = arith.constant 2.000000e-01 : f32
    %15 = vector.broadcast %cst_7 : f32 to vector<64x64xf32>
    %16 = arith.mulf %15, %12 : vector<64x64xf32>
    %17 = arith.select %14, %12, %16 : vector<64x64xi1>, vector<64x64xf32>
    %c0_8 = arith.constant 0 : index
    %c0_9 = arith.constant 0 : index
    %18 = vector.load %arg4[%c0_8, %c0_9] : memref<64x64xf32, #tpu.memory_space<vmem>>, vector<64x64xf32>
    %19 = arith.addf %17, %18 : vector<64x64xf32>
    %cst_10 = arith.constant dense<0xFF800000> : vector<64xf32>
    %20 = vector.multi_reduction <maximumf>, %19, %cst_10 [1] : vector<64x64xf32> to vector<64xf32>
    %21 = vector.shape_cast %20 : vector<64xf32> to vector<64x1xf32>
    %22 = vector.broadcast %21 : vector<64x1xf32> to vector<64x64xf32>
    %23 = arith.subf %19, %22 : vector<64x64xf32>
    %24 = math.exp %23 : vector<64x64xf32>
    %cst_11 = arith.constant dense<0.000000e+00> : vector<64xf32>
    %25 = vector.multi_reduction <add>, %24, %cst_11 [1] : vector<64x64xf32> to vector<64xf32>
    %26 = vector.shape_cast %25 : vector<64xf32> to vector<64x1xf32>
    %27 = tpu.reciprocal %26 {approx = true} : vector<64x1xf32> -> vector<64x1xf32>
    %28 = arith.mulf %26, %27 : vector<64x1xf32>
    %cst_12 = arith.constant 2.000000e+00 : f32
    %29 = vector.broadcast %cst_12 : f32 to vector<64x1xf32>
    %30 = arith.subf %29, %28 : vector<64x1xf32>
    %31 = arith.mulf %27, %30 : vector<64x1xf32>
    %32 = vector.broadcast %31 : vector<64x1xf32> to vector<64x64xf32>
    %33 = arith.mulf %24, %32 : vector<64x64xf32>
    %cst_13 = arith.constant dense<0.000000e+00> : vector<64x32xf32>
    %34 = tpu.matmul %33, %3, %cst_13 {dimension_numbers = #tpu.dot_dimension_numbers<[1], [0], [0], [1], [0, 0, 1, 1], [], []>} : vector<64x64xf32>, vector<64x32xf32>, vector<64x32xf32> -> vector<64x32xf32>
    %cst_14 = arith.constant 0.000000e+00 : f32
    %35 = vector.broadcast %cst_14 : f32 to vector<64x32xf32>
    %36 = arith.cmpf ogt, %34, %35 : vector<64x32xf32>
    %cst_15 = arith.constant 0.000000e+00 : f32
    %37 = vector.broadcast %cst_15 : f32 to vector<64x32xf32>
    %38 = arith.minimumf %34, %37 : vector<64x32xf32>
    %39 = math.exp %38 : vector<64x32xf32>
    %cst_16 = arith.constant 1.000000e+00 : f32
    %40 = vector.broadcast %cst_16 : f32 to vector<64x32xf32>
    %41 = arith.subf %39, %40 : vector<64x32xf32>
    %42 = arith.select %36, %34, %41 : vector<64x32xi1>, vector<64x32xf32>
    %c0_17 = arith.constant 0 : index
    %c0_18 = arith.constant 0 : index
    %43 = vector.load %arg5[%c0_17, %c0_18] : memref<64x32xf32, #tpu.memory_space<vmem>>, vector<64x32xf32>
    tpu.vector_store %arg5[%c0_17, %c0_18], %42 {strides = array<i32>} : memref<64x32xf32, #tpu.memory_space<vmem>>, vector<64x32xf32>,
    return
  }
  func.func @transform_0(%arg0: i32) -> (i32, i32) {
    %c0_i32 = arith.constant 0 : i32
    %c0_i32_0 = arith.constant 0 : i32
    return %arg0, %c0_i32 : i32, i32
  }
  func.func @transform_1(%arg0: i32) -> (i32, i32) {
    %c0_i32 = arith.constant 0 : i32
    %c0_i32_0 = arith.constant 0 : i32
    %c0_i32_1 = arith.constant 0 : i32
    return %c0_i32, %c0_i32_0 : i32, i32
  }
  func.func @transform_2(%arg0: i32) -> (i32, i32) {
    %c0_i32 = arith.constant 0 : i32
    %c0_i32_0 = arith.constant 0 : i32
    %c0_i32_1 = arith.constant 0 : i32
    return %c0_i32, %c0_i32_0 : i32, i32
  }
  func.func @transform_3(%arg0: i32) -> (i32, i32) {
    %c0_i32 = arith.constant 0 : i32
    %c0_i32_0 = arith.constant 0 : i32
    %c0_i32_1 = arith.constant 0 : i32
    return %c0_i32, %c0_i32_0 : i32, i32
  }
  func.func @transform_4(%arg0: i32) -> (i32, i32) {
    %c0_i32 = arith.constant 0 : i32
    %c0_i32_0 = arith.constant 0 : i32
    return %arg0, %c0_i32 : i32, i32
  }
}

</mosaic_0001>

<llo_original>
// kernel: tpu_custom_call.1
$region0: #{tpu_custom_call.1}
  #allocation0 [shape = 'u32[]', space=smem, size = 0x4, offset = 0x4, fixed_abs, tag = 'smem constant byte address 0x4 - core index']
  #allocation1 [shape = 'u32[72,128]{1,0:T(1,128)}', space=vmem, size = 0x9000, scoped, tag = 'internal scratch']
  %s0 = inlined_call_operand.vmem [shape: f32[64,16], index: 0, kind: input, shape index: {}]
  %s1 = inlined_call_operand.vmem [shape: f32[16,33], index: 1, kind: input, shape index: {}]
  %s2 = inlined_call_operand.vmem [shape: f32[1,32], index: 2, kind: input, shape index: {}]
  %s3 = inlined_call_operand.vmem [shape: f32[64,64], index: 3, kind: input, shape index: {}]
  %s4 = inlined_call_operand.vmem [shape: f32[64,32], index: 4, kind: output, shape index: {}]
  %s5 = sld [smem:[#allocation0]]
  $region26: #{tpu_custom_call.1} parent=0
    _
  %s7 = ssub.s32 1, %s5
  %s8 = scalar_select 0, %s7, %s5
  // Predicated region
  $region2: #{tpu_custom_call.1} parent=0 // pred_check
    _
  $region3: #{tpu_custom_call.1} parent=0 // pred_check_branch
    %10 = sbr.rel (0) target = $region5
  $region4: #{tpu_custom_call.1} parent=0 // pred_region
    _
  $region5: #{tpu_custom_call.1} parent=0 // pred_fallthru
    _
  // Predicated region
  $region6: #{tpu_custom_call.1} parent=0 // pred_check
    _
  $region7: #{tpu_custom_call.1} parent=0 // pred_check_branch
    %12 = sbr.rel (0) target = $region9
  $region8: #{tpu_custom_call.1} parent=0 // pred_region
    _
  $region9: #{tpu_custom_call.1} parent=0 // pred_fallthru
    _
  // Predicated region
  $region10: #{tpu_custom_call.1} parent=0 // pred_check
    _
  $region11: #{tpu_custom_call.1} parent=0 // pred_check_branch
    %14 = sbr.rel (0) target = $region13
  $region12: #{tpu_custom_call.1} parent=0 // pred_region
    _
  $region13: #{tpu_custom_call.1} parent=0 // pred_fallthru
    _
  // Predicated region
  $region14: #{tpu_custom_call.1} parent=0 // pred_check
    _
  $region15: #{tpu_custom_call.1} parent=0 // pred_check_branch
    %16 = sbr.rel (0) target = $region17
  $region16: #{tpu_custom_call.1} parent=0 // pred_region
    _
  $region17: #{tpu_custom_call.1} parent=0 // pred_fallthru
    _
  %v17 = vld [vmem:[%s0] sm:$0xff]
  %v18 = vld [vmem:[%s0 + $0x8] sm:$0xff]
  %v19 = vld [vmem:[%s0 + $0x10] sm:$0xff]
  %v20 = vld [vmem:[%s0 + $0x18] sm:$0xff]
  %v21 = vld [vmem:[%s0 + $0x20] sm:$0xff]
  %v22 = vld [vmem:[%s0 + $0x28] sm:$0xff]
  %v23 = vld [vmem:[%s0 + $0x30] sm:$0xff]
  %v24 = vld [vmem:[%s0 + $0x38] sm:$0xff]
  %v25 = vld [vmem:[%s1] sm:$0xff]
  %v26 = vld [vmem:[%s1 + $0x8] sm:$0xff]
  %vm27 = vcmask 130048
  %v29 = vsel %vm27, %v17, 0
  %v32 = vsel %vm27, %v18, 0
  %v35 = vsel %vm27, %v19, 0
  %v38 = vsel %vm27, %v20, 0
  %v41 = vsel %vm27, %v21, 0
  %v44 = vsel %vm27, %v22, 0
  %v47 = vsel %vm27, %v23, 0
  %v50 = vsel %vm27, %v24, 0
  %52 = vmatpush.msra.mxu0 0.0
  %53 = vmatpush.msra.mxu0 0.0
  %54 = vmatpush.msra.mxu0 0.0
  %55 = vmatpush.msra.mxu0 0.0
  %56 = vmatpush.msra.mxu0 0.0
  %57 = vmatpush.msra.mxu0 0.0
  %58 = vmatpush.msra.mxu0 0.0
  %59 = vmatpush.msra.mxu0 0.0
  %60 = vmatpush.msra.mxu0 0.0
  %61 = vmatpush.msra.mxu0 0.0
  %62 = vmatpush.msra.mxu0 0.0
  %63 = vmatpush.msra.mxu0 0.0
  %64 = vmatpush.msra.mxu0 0.0
  %65 = vmatpush.msra.mxu0 0.0
  %66 = vmatpush.msra.mxu0 %v26
  %67 = vmatpush.msra.mxu0 %v25
  %68 = vmatmul.f32.gmra.mxu0 %v29
  %v69 = vpop.f32.mrf.mxu0
  %v70 = vadd.f32 0.0, %v69
  %71 = vmatmul.f32.gmra.mxu0 %v32
  %v72 = vpop.f32.mrf.mxu0
  %v73 = vadd.f32 0.0, %v72
  %74 = vmatmul.f32.gmra.mxu0 %v35
  %v75 = vpop.f32.mrf.mxu0
  %v76 = vadd.f32 0.0, %v75
  %77 = vmatmul.f32.gmra.mxu0 %v38
  %v78 = vpop.f32.mrf.mxu0
  %v79 = vadd.f32 0.0, %v78
  %80 = vmatmul.f32.gmra.mxu0 %v41
  %v81 = vpop.f32.mrf.mxu0
  %v82 = vadd.f32 0.0, %v81
  %83 = vmatmul.f32.gmra.mxu0 %v44
  %v84 = vpop.f32.mrf.mxu0
  %v85 = vadd.f32 0.0, %v84
  %86 = vmatmul.f32.gmra.mxu0 %v47
  %v87 = vpop.f32.mrf.mxu0
  %v88 = vadd.f32 0.0, %v87
  %89 = vmatmul.f32.gmra.mxu0 %v50
  %v90 = vpop.f32.mrf.mxu0
  %v91 = vadd.f32 0.0, %v90
  %92 = vdwg.mxu0
  %v93 = vld [vmem:[%s2] sm:$0x1]
  %v95 = vperm.slane %v93, 0
  %v97 = vmul.f32 %v70, %v95
  %v98 = vmul.f32 %v73, %v95
  %v99 = vmul.f32 %v76, %v95
  %v100 = vmul.f32 %v79, %v95
  %v101 = vmul.f32 %v82, %v95
  %v102 = vmul.f32 %v85, %v95
  %v103 = vmul.f32 %v88, %v95
  %v104 = vmul.f32 %v91, %v95
  %vm105 = vcmask 261120
  %v106 = vsel %vm105, %v97, 0.0
  %107 = vadd.xlane.f32.xlu0 %v106
  %v108 = vpop.xlane.xlu0 %107
  %v109 = vsel %vm105, %v98, 0.0
  %110 = vadd.xlane.f32.xlu0 %v109
  %v111 = vpop.xlane.xlu0 %110
  %v112 = vsel %vm105, %v99, 0.0
  %113 = vadd.xlane.f32.xlu0 %v112
  %v114 = vpop.xlane.xlu0 %113
  %v115 = vsel %vm105, %v100, 0.0
  %116 = vadd.xlane.f32.xlu0 %v115
  %v117 = vpop.xlane.xlu0 %116
  %v118 = vsel %vm105, %v101, 0.0
  %119 = vadd.xlane.f32.xlu0 %v118
  %v120 = vpop.xlane.xlu0 %119
  %v121 = vsel %vm105, %v102, 0.0
  %122 = vadd.xlane.f32.xlu0 %v121
  %v123 = vpop.xlane.xlu0 %122
  %v124 = vsel %vm105, %v103, 0.0
  %125 = vadd.xlane.f32.xlu0 %v124
  %v126 = vpop.xlane.xlu0 %125
  %v127 = vsel %vm105, %v104, 0.0
  %128 = vadd.xlane.f32.xlu0 %v127
  %v129 = vpop.xlane.xlu0 %128
  %131 = vset.pattern.permute.xlu0 32
  %132 = vperm.xlu0 %131, %v70
  %v133 = vpop.permute.xlu0 %132
  %136 = vset.pattern.permute.xlu0 32
  %137 = vperm.xlu0 %136, %v73
  %v138 = vpop.permute.xlu0 %137
  %141 = vset.pattern.permute.xlu0 32
  %142 = vperm.xlu0 %141, %v76
  %v143 = vpop.permute.xlu0 %142
  %146 = vset.pattern.permute.xlu0 32
  %147 = vperm.xlu0 %146, %v79
  %v148 = vpop.permute.xlu0 %147
  %151 = vset.pattern.permute.xlu0 32
  %152 = vperm.xlu0 %151, %v82
  %v153 = vpop.permute.xlu0 %152
  %156 = vset.pattern.permute.xlu0 32
  %157 = vperm.xlu0 %156, %v85
  %v158 = vpop.permute.xlu0 %157
  %161 = vset.pattern.permute.xlu0 32
  %162 = vperm.xlu0 %161, %v88
  %v163 = vpop.permute.xlu0 %162
  %166 = vset.pattern.permute.xlu0 32
  %167 = vperm.xlu0 %166, %v91
  %v168 = vpop.permute.xlu0 %167
  %v178 = vlaneseq
  %v179 = vand.u32 %v178, 127
  %v180 = vperm.slane %v108, %v179
  %v181 = vadd.s32 %v179, 4294967288
  %v182 = vperm.slane %v111, %v181
  %vm183 = vcmask 130112
  %v184 = vsel %vm183, %v182, %v180
  %v185 = vadd.s32 %v179, 4294967280
  %v186 = vperm.slane %v114, %v185
  %vm187 = vcmask 195712
  %v188 = vsel %vm187, %v186, %v184
  %v189 = vadd.s32 %v179, 4294967272
  %v190 = vperm.slane %v117, %v189
  %vm191 = vcmask 261312
  %v192 = vsel %vm191, %v190, %v188
  %v193 = vadd.s32 %v179, 4294967264
  %v194 = vperm.slane %v120, %v193
  %vm195 = vcmask 326912
  %v196 = vsel %vm195, %v194, %v192
  %v197 = vadd.s32 %v179, 4294967256
  %v198 = vperm.slane %v123, %v197
  %vm199 = vcmask 392512
  %v200 = vsel %vm199, %v198, %v196
  %v201 = vadd.s32 %v179, 4294967248
  %v202 = vperm.slane %v126, %v201
  %vm203 = vcmask 458112
  %v204 = vsel %vm203, %v202, %v200
  %v205 = vadd.s32 %v179, 4294967240
  %v206 = vperm.slane %v129, %v205
  %vm207 = vcmask 523712
  %v208 = vsel %vm207, %v206, %v204
  %vm209 = vcmask 1042434
  %v210 = vsel %vm209, %v208, %v208
  %vm211 = vcmask 1043459
  %v212 = vsel %vm211, %v208, %v210
  %vm213 = vcmask 1044484
  %v214 = vsel %vm213, %v208, %v212
  %vm215 = vcmask 1045509
  %v216 = vsel %vm215, %v208, %v214
  %vm217 = vcmask 1046534
  %v218 = vsel %vm217, %v208, %v216
  %vm219 = vcmask 1047559
  %v220 = vsel %vm219, %v208, %v218
  %v222 = vadd.f32 %v133, %v220
  %v223 = vadd.f32 %v138, %v220
  %v224 = vadd.f32 %v143, %v220
  %v225 = vadd.f32 %v148, %v220
  %v226 = vadd.f32 %v153, %v220
  %v227 = vadd.f32 %v158, %v220
  %v228 = vadd.f32 %v163, %v220
  %v229 = vadd.f32 %v168, %v220
  %vm230 = vcmp.gt.f32.partialorder %v222, 0.0
  %vm231 = vcmp.gt.f32.partialorder %v223, 0.0
  %vm232 = vcmp.gt.f32.partialorder %v224, 0.0
  %vm233 = vcmp.gt.f32.partialorder %v225, 0.0
  %vm234 = vcmp.gt.f32.partialorder %v226, 0.0
  %vm235 = vcmp.gt.f32.partialorder %v227, 0.0
  %vm236 = vcmp.gt.f32.partialorder %v228, 0.0
  %vm237 = vcmp.gt.f32.partialorder %v229, 0.0
  %v238 = vmul.f32 %v222, 0.2
  %v239 = vmul.f32 %v223, 0.2
  %v240 = vmul.f32 %v224, 0.2
  %v241 = vmul.f32 %v225, 0.2
  %v242 = vmul.f32 %v226, 0.2
  %v243 = vmul.f32 %v227, 0.2
  %v244 = vmul.f32 %v228, 0.2
  %v245 = vmul.f32 %v229, 0.2
  %v246 = vsel %vm230, %v222, %v238
  %v247 = vsel %vm231, %v223, %v239
  %v248 = vsel %vm232, %v224, %v240
  %v249 = vsel %vm233, %v225, %v241
  %v250 = vsel %vm234, %v226, %v242
  %v251 = vsel %vm235, %v227, %v243
  %v252 = vsel %vm236, %v228, %v244
  %v253 = vsel %vm237, %v229, %v245
  %v254 = vld [vmem:[%s3] sm:$0xff]
  %v255 = vld [vmem:[%s3 + $0x8] sm:$0xff]
  %v256 = vld [vmem:[%s3 + $0x10] sm:$0xff]
  %v257 = vld [vmem:[%s3 + $0x18] sm:$0xff]
  %v258 = vld [vmem:[%s3 + $0x20] sm:$0xff]
  %v259 = vld [vmem:[%s3 + $0x28] sm:$0xff]
  %v260 = vld [vmem:[%s3 + $0x30] sm:$0xff]
  %v261 = vld [vmem:[%s3 + $0x38] sm:$0xff]
  %v262 = vadd.f32 %v246, %v254
  %v263 = vadd.f32 %v247, %v255
  %v264 = vadd.f32 %v248, %v256
  %v265 = vadd.f32 %v249, %v257
  %v266 = vadd.f32 %v250, %v258
  %v267 = vadd.f32 %v251, %v259
  %v268 = vadd.f32 %v252, %v260
  %v269 = vadd.f32 %v253, %v261
  %vm270 = vcmask 523264
  %v271 = vsel %vm270, %v262, -inf
  %272 = vmax.xlane.f32.xlu0 %v271
  %v273 = vpop.xlane.xlu0 %272
  %v274 = vsel %vm270, %v263, -inf
  %275 = vmax.xlane.f32.xlu0 %v274
  %v276 = vpop.xlane.xlu0 %275
  %v277 = vsel %vm270, %v264, -inf
  %278 = vmax.xlane.f32.xlu0 %v277
  %v279 = vpop.xlane.xlu0 %278
  %v280 = vsel %vm270, %v265, -inf
  %281 = vmax.xlane.f32.xlu0 %v280
  %v282 = vpop.xlane.xlu0 %281
  %v283 = vsel %vm270, %v266, -inf
  %284 = vmax.xlane.f32.xlu0 %v283
  %v285 = vpop.xlane.xlu0 %284
  %v286 = vsel %vm270, %v267, -inf
  %287 = vmax.xlane.f32.xlu0 %v286
  %v288 = vpop.xlane.xlu0 %287
  %v289 = vsel %vm270, %v268, -inf
  %290 = vmax.xlane.f32.xlu0 %v289
  %v291 = vpop.xlane.xlu0 %290
  %v292 = vsel %vm270, %v269, -inf
  %293 = vmax.xlane.f32.xlu0 %v292
  %v294 = vpop.xlane.xlu0 %293
  %v295 = vsub.f32 %v262, %v273
  %v296 = vsub.f32 %v263, %v276
  %v297 = vsub.f32 %v264, %v279
  %v298 = vsub.f32 %v265, %v282
  %v299 = vsub.f32 %v266, %v285
  %v300 = vsub.f32 %v267, %v288
  %v301 = vsub.f32 %v268, %v291
  %v302 = vsub.f32 %v269, %v294
  %v303 = vmul.f32 %v295, 1.442695
  %v304 = vpow.pop %v303
  %v305 = vmul.f32 %v296, 1.442695
  %v306 = vpow.pop %v305
  %v307 = vmul.f32 %v297, 1.442695
  %v308 = vpow.pop %v307
  %v309 = vmul.f32 %v298, 1.442695
  %v310 = vpow.pop %v309
  %v311 = vmul.f32 %v299, 1.442695
  %v312 = vpow.pop %v311
  %v313 = vmul.f32 %v300, 1.442695
  %v314 = vpow.pop %v313
  %v315 = vmul.f32 %v301, 1.442695
  %v316 = vpow.pop %v315
  %v317 = vmul.f32 %v302, 1.442695
  %v318 = vpow.pop %v317
  %v319 = vsel %vm270, %v304, 0.0
  %320 = vadd.xlane.f32.xlu0 %v319
  %v321 = vpop.xlane.xlu0 %320
  %v322 = vsel %vm270, %v306, 0.0
  %323 = vadd.xlane.f32.xlu0 %v322
  %v324 = vpop.xlane.xlu0 %323
  %v325 = vsel %vm270, %v308, 0.0
  %326 = vadd.xlane.f32.xlu0 %v325
  %v327 = vpop.xlane.xlu0 %326
  %v328 = vsel %vm270, %v310, 0.0
  %329 = vadd.xlane.f32.xlu0 %v328
  %v330 = vpop.xlane.xlu0 %329
  %v331 = vsel %vm270, %v312, 0.0
  %332 = vadd.xlane.f32.xlu0 %v331
  %v333 = vpop.xlane.xlu0 %332
  %v334 = vsel %vm270, %v314, 0.0
  %335 = vadd.xlane.f32.xlu0 %v334
  %v336 = vpop.xlane.xlu0 %335
  %v337 = vsel %vm270, %v316, 0.0
  %338 = vadd.xlane.f32.xlu0 %v337
  %v339 = vpop.xlane.xlu0 %338
  %v340 = vsel %vm270, %v318, 0.0
  %341 = vadd.xlane.f32.xlu0 %v340
  %v342 = vpop.xlane.xlu0 %341
  %v343 = vrcp.pop %v321
  %v344 = vrcp.pop %v324
  %v345 = vrcp.pop %v327
  %v346 = vrcp.pop %v330
  %v347 = vrcp.pop %v333
  %v348 = vrcp.pop %v336
  %v349 = vrcp.pop %v339
  %v350 = vrcp.pop %v342
  %v351 = vmul.f32 %v321, %v343
  %v352 = vmul.f32 %v324, %v344
  %v353 = vmul.f32 %v327, %v345
  %v354 = vmul.f32 %v330, %v346
  %v355 = vmul.f32 %v333, %v347
  %v356 = vmul.f32 %v336, %v348
  %v357 = vmul.f32 %v339, %v349
  %v358 = vmul.f32 %v342, %v350
  %v359 = vsub.f32 2.0, %v351
  %v360 = vsub.f32 2.0, %v352
  %v361 = vsub.f32 2.0, %v353
  %v362 = vsub.f32 2.0, %v354
  %v363 = vsub.f32 2.0, %v355
  %v364 = vsub.f32 2.0, %v356
  %v365 = vsub.f32 2.0, %v357
  %v366 = vsub.f32 2.0, %v358
  %v367 = vmul.f32 %v343, %v359
  %v368 = vmul.f32 %v344, %v360
  %v369 = vmul.f32 %v345, %v361
  %v370 = vmul.f32 %v346, %v362
  %v371 = vmul.f32 %v347, %v363
  %v372 = vmul.f32 %v348, %v364
  %v373 = vmul.f32 %v349, %v365
  %v374 = vmul.f32 %v350, %v366
  %v375 = vmul.f32 %v304, %v367
  %v376 = vmul.f32 %v306, %v368
  %v377 = vmul.f32 %v308, %v369
  %v378 = vmul.f32 %v310, %v370
  %v379 = vmul.f32 %v312, %v371
  %v380 = vmul.f32 %v314, %v372
  %v381 = vmul.f32 %v316, %v373
  %v382 = vmul.f32 %v318, %v374
  %v384 = vsel %vm270, %v375, 0
  %v387 = vsel %vm270, %v376, 0
  %v390 = vsel %vm270, %v377, 0
  %v393 = vsel %vm270, %v378, 0
  %v396 = vsel %vm270, %v379, 0
  %v399 = vsel %vm270, %v380, 0
  %v402 = vsel %vm270, %v381, 0
  %v405 = vsel %vm270, %v382, 0
  %407 = vmatpush.msra.mxu0 0.0
  %408 = vmatpush.msra.mxu0 0.0
  %409 = vmatpush.msra.mxu0 0.0
  %410 = vmatpush.msra.mxu0 0.0
  %411 = vmatpush.msra.mxu0 0.0
  %412 = vmatpush.msra.mxu0 0.0
  %413 = vmatpush.msra.mxu0 0.0
  %414 = vmatpush.msra.mxu0 0.0
  %415 = vmatpush.msra.mxu0 %v91
  %416 = vmatpush.msra.mxu0 %v88
  %417 = vmatpush.msra.mxu0 %v85
  %418 = vmatpush.msra.mxu0 %v82
  %419 = vmatpush.msra.mxu0 %v79
  %420 = vmatpush.msra.mxu0 %v76
  %421 = vmatpush.msra.mxu0 %v73
  %422 = vmatpush.msra.mxu0 %v70
  %423 = vmatmul.f32.gmra.mxu0 %v384
  %v424 = vpop.f32.mrf.mxu0
  %v425 = vadd.f32 0.0, %v424
  %426 = vmatmul.f32.gmra.mxu0 %v387
  %v427 = vpop.f32.mrf.mxu0
  %v428 = vadd.f32 0.0, %v427
  %429 = vmatmul.f32.gmra.mxu0 %v390
  %v430 = vpop.f32.mrf.mxu0
  %v431 = vadd.f32 0.0, %v430
  %432 = vmatmul.f32.gmra.mxu0 %v393
  %v433 = vpop.f32.mrf.mxu0
  %v434 = vadd.f32 0.0, %v433
  %435 = vmatmul.f32.gmra.mxu0 %v396
  %v436 = vpop.f32.mrf.mxu0
  %v437 = vadd.f32 0.0, %v436
  %438 = vmatmul.f32.gmra.mxu0 %v399
  %v439 = vpop.f32.mrf.mxu0
  %v440 = vadd.f32 0.0, %v439
  %441 = vmatmul.f32.gmra.mxu0 %v402
  %v442 = vpop.f32.mrf.mxu0
  %v443 = vadd.f32 0.0, %v442
  %444 = vmatmul.f32.gmra.mxu0 %v405
  %v445 = vpop.f32.mrf.mxu0
  %v446 = vadd.f32 0.0, %v445
  %447 = vdwg.mxu0
  %vm448 = vcmp.gt.f32.partialorder %v425, 0.0
  %vm449 = vcmp.gt.f32.partialorder %v428, 0.0
  %vm450 = vcmp.gt.f32.partialorder %v431, 0.0
  %vm451 = vcmp.gt.f32.partialorder %v434, 0.0
  %vm452 = vcmp.gt.f32.partialorder %v437, 0.0
  %vm453 = vcmp.gt.f32.partialorder %v440, 0.0
  %vm454 = vcmp.gt.f32.partialorder %v443, 0.0
  %vm455 = vcmp.gt.f32.partialorder %v446, 0.0
  %v456 = vmin.f32 %v425, 0.0
  %v457 = vmin.f32 %v428, 0.0
  %v458 = vmin.f32 %v431, 0.0
  %v459 = vmin.f32 %v434, 0.0
  %v460 = vmin.f32 %v437, 0.0
  %v461 = vmin.f32 %v440, 0.0
  %v462 = vmin.f32 %v443, 0.0
  %v463 = vmin.f32 %v446, 0.0
  %v464 = vmul.f32 %v456, 1.442695
  %v465 = vpow.pop %v464
  %v466 = vmul.f32 %v457, 1.442695
  %v467 = vpow.pop %v466
  %v468 = vmul.f32 %v458, 1.442695
  %v469 = vpow.pop %v468
  %v470 = vmul.f32 %v459, 1.442695
  %v471 = vpow.pop %v470
  %v472 = vmul.f32 %v460, 1.442695
  %v473 = vpow.pop %v472
  %v474 = vmul.f32 %v461, 1.442695
  %v475 = vpow.pop %v474
  %v476 = vmul.f32 %v462, 1.442695
  %v477 = vpow.pop %v476
  %v478 = vmul.f32 %v463, 1.442695
  %v479 = vpow.pop %v478
  %v480 = vsub.f32 %v465, 1.0
  %v481 = vsub.f32 %v467, 1.0
  %v482 = vsub.f32 %v469, 1.0
  %v483 = vsub.f32 %v471, 1.0
  %v484 = vsub.f32 %v473, 1.0
  %v485 = vsub.f32 %v475, 1.0
  %v486 = vsub.f32 %v477, 1.0
  %v487 = vsub.f32 %v479, 1.0
  %v488 = vsel %vm448, %v425, %v480
  %v489 = vsel %vm449, %v428, %v481
  %v490 = vsel %vm450, %v431, %v482
  %v491 = vsel %vm451, %v434, %v483
  %v492 = vsel %vm452, %v437, %v484
  %v493 = vsel %vm453, %v440, %v485
  %v494 = vsel %vm454, %v443, %v486
  %v495 = vsel %vm455, %v446, %v487
  %496 = vst.msk [vmem:[%s4] sm:$0xff] %vm105, %v488
  %497 = vst.msk [vmem:[%s4 + $0x8] sm:$0xff] %vm105, %v489
  %498 = vst.msk [vmem:[%s4 + $0x10] sm:$0xff] %vm105, %v490
  %499 = vst.msk [vmem:[%s4 + $0x18] sm:$0xff] %vm105, %v491
  %500 = vst.msk [vmem:[%s4 + $0x20] sm:$0xff] %vm105, %v492
  %501 = vst.msk [vmem:[%s4 + $0x28] sm:$0xff] %vm105, %v493
  %502 = vst.msk [vmem:[%s4 + $0x30] sm:$0xff] %vm105, %v494
  %503 = vst.msk [vmem:[%s4 + $0x38] sm:$0xff] %vm105, %v495
  // Predicated region
  $region18: #{tpu_custom_call.1} parent=0 // pred_check
    _
  $region19: #{tpu_custom_call.1} parent=0 // pred_check_branch
    %505 = sbr.rel (0) target = $region21
  $region20: #{tpu_custom_call.1} parent=0 // pred_region
    _
  $region21: #{tpu_custom_call.1} parent=0 // pred_fallthru
    _
  // Predicated region
  $region22: #{tpu_custom_call.1} parent=0 // pred_check
    _
  $region23: #{tpu_custom_call.1} parent=0 // pred_check_branch
    %507 = sbr.rel (0) target = $region25
  $region24: #{tpu_custom_call.1} parent=0 // pred_region
    _
  $region25: #{tpu_custom_call.1} parent=0 // pred_fallthru
    _

</llo_original>
